<compile_context>
chip_gen: v7x
topology: tpu7x:2x2x1
jax: 0.10.0
libtpu: 0.0.40
codegen_flags: <defaults>
</compile_context>

<pallas_src>
import functools

import jax
import jax.numpy as jnp
from jax.experimental import pallas as pl
from jax.experimental.pallas import tpu as pltpu


# ------------------------------------------------------------------ kernel ---

def _channel_attention_kernel(x_ref, w1_ref, w2_ref, o_ref, *, hw_true):
    """Fused ChannelAttention forward for a (Bt, C, HWp) activation tile.

    x_ref : (Bt, C, HWp)  activation slab (lane axis = padded H*W)
    w1_ref: (C, Cr)       first 1x1 conv weight, transposed  (v @ w1)
    w2_ref: (Cr, C)       second 1x1 conv weight, transposed (h @ w2)
    o_ref : (Bt, C, HWp)  output slab
    hw_true: real H*W (static); lanes >= hw_true are zero padding.
    """
    bt, c, hwp = x_ref.shape

    # ---- pooling pass: one read of the slab ------------------------------
    xv = x_ref[...]                                          # (Bt, C, HWp)

    # avg-pool: f32 accumulation over the lane axis; zero padding lanes are
    # harmless for the sum, and we divide by the TRUE spatial size.
    avg = jnp.sum(xv, axis=-1, dtype=jnp.float32) * (1.0 / hw_true)   # (Bt, C)

    # max-pool: mask padded lanes with -inf (only needed when padded).
    if hwp != hw_true:
        lane = jax.lax.broadcasted_iota(jnp.int32, (bt, c, hwp), 2)
        xm = jnp.where(lane < hw_true, xv, jnp.array(-jnp.inf, xv.dtype))
    else:
        xm = xv
    mx = jnp.max(xm, axis=-1).astype(jnp.float32)            # (Bt, C)

    # ---- shared MLP: single stacked GEMM pair (ReLU stays per-row) -------
    w1 = w1_ref[...].astype(jnp.float32)                     # (C, Cr)
    w2 = w2_ref[...].astype(jnp.float32)                     # (Cr, C)
    v = jnp.concatenate([avg, mx], axis=0)                   # (2*Bt, C)
    h = jnp.maximum(jnp.dot(v, w1, preferred_element_type=jnp.float32), 0.0)
    s2 = jnp.dot(h, w2, preferred_element_type=jnp.float32)  # (2*Bt, C)
    s = s2[:bt] + s2[bt:]                                    # fc(avg) + fc(mx)

    att = jax.nn.sigmoid(s)                                  # (Bt, C)
    # out = x * att + x == x * (1 + att); do the big multiply in x's dtype.
    scale = (1.0 + att).astype(o_ref.dtype)[:, :, None]      # (Bt, C, 1)

    # ---- epilogue: re-read the slab (short live range, no spills) --------
    o_ref[...] = x_ref[...] * scale


# ----------------------------------------------------------------- wrapper ---

def _choose_block_batch(B, C, HWp, itemsize):
    """Pick a batch tile Bt: ~1 MiB tiles, >=2 grid steps, VMEM-safe."""
    if B <= 1:
        return 1
    bytes_per_row = C * HWp * itemsize
    bt = max(1, (1 << 20) // max(bytes_per_row, 1))   # target ~1 MiB per tile
    bt = min(bt, max(1, B // 2))                       # keep >=2 steps (v7x 2 TCs)
    # VMEM guard: in + out tiles, double-buffered (~4x tile) must stay well
    # inside v5e's 16 MiB scoped default (and v7x's 32 MiB scoped / 64 MiB phys).
    while bt > 1 and bt * bytes_per_row > (2 << 20):
        bt -= 1
    return bt


def channel_attention(x, w1, w2):
    """x: (B, C, H, W) NCHW; w1: (Cr, C, 1, 1); w2: (C, Cr, 1, 1) (PyTorch shapes)."""
    B, C, H, W = x.shape
    Cr = w1.shape[0]
    HW = H * W

    # Lane-dense layout: spatial axis on the 128-lane axis, padded to 128.
    HWp = ((HW + 127) // 128) * 128
    x3 = x.reshape(B, C, HW)
    if HWp != HW:
        x3 = jnp.pad(x3, ((0, 0), (0, 0), (0, HWp - HW)))

    Bt = _choose_block_batch(B, C, HWp, x.dtype.itemsize)
    Bp = pl.cdiv(B, Bt) * Bt
    if Bp != B:
        x3 = jnp.pad(x3, ((0, Bp - B), (0, 0), (0, 0)))

    w1m = w1.reshape(Cr, C).T                 # (C, Cr)
    w2m = w2.reshape(C, Cr).T                 # (Cr, C)

    kernel = functools.partial(_channel_attention_kernel, hw_true=HW)

    out = pl.pallas_call(
        kernel,
        out_shape=jax.ShapeDtypeStruct((Bp, C, HWp), x.dtype),
        grid_spec=pltpu.PrefetchScalarGridSpec(
            num_scalar_prefetch=0,
            grid=(Bp // Bt,),
            in_specs=[
                pl.BlockSpec((Bt, C, HWp), lambda b: (b, 0, 0)),
                pl.BlockSpec((C, Cr), lambda b: (0, 0)),
                pl.BlockSpec((Cr, C), lambda b: (0, 0)),
            ],
            out_specs=pl.BlockSpec((Bt, C, HWp), lambda b: (b, 0, 0)),
        ),
        compiler_params=pltpu.CompilerParams(
            dimension_semantics=("parallel",)),   # v7x: shard batch tiles over 2 TCs
    )(x3, w1m, w2m)

    out = out[:B, :, :HW]
    return out.reshape(B, C, H, W)


# ------------------------------------------------------------------- params --

def init_params(key, in_planes, ratio=16):
    reduced = max(in_planes // ratio, 1)
    k1, k2 = jax.random.split(key)
    # PyTorch Conv2d weight shapes: (out, in, 1, 1); bias=False in the module.
    w1 = jax.random.normal(k1, (reduced, in_planes, 1, 1), jnp.float32) * 0.1
    w2 = jax.random.normal(k2, (in_planes, reduced, 1, 1), jnp.float32) * 0.1
    return w1, w2


def reference_forward(x, w1, w2):
    """Plain-JAX reference of the PyTorch module for a correctness check."""
    B, C, H, W = x.shape
    Cr = w1.shape[0]
    avg = jnp.mean(x, axis=(2, 3))                           # (B, C)
    mx = jnp.max(x, axis=(2, 3))                             # (B, C)
    w1m = w1.reshape(Cr, C)
    w2m = w2.reshape(C, Cr)

    def fc(v):
        h = jnp.maximum(v @ w1m.T, 0.0)
        return h @ w2m.T

    att = jax.nn.sigmoid(fc(avg) + fc(mx))                   # (B, C)
    return x * att[:, :, None, None] + x


# --------------------------------------------------------------------- main --

if __name__ == "__main__":
    key = jax.random.PRNGKey(0)
    k_x, k_p = jax.random.split(key)

    B, C, H, W = 4, 64, 16, 16          # ratio=16 -> reduced_planes = 4
    x = jax.random.normal(k_x, (B, C, H, W), jnp.float32)
    w1, w2 = init_params(k_p, C, ratio=16)

    out = channel_attention(x, w1, w2)
    out = jax.block_until_ready(out)
    assert out.shape == (B, C, H, W), out.shape

    ref = reference_forward(x, w1, w2)
    assert jnp.allclose(out, ref, atol=1e-5, rtol=1e-5), (
        float(jnp.max(jnp.abs(out - ref))))

    print("KERNEL_OK")
</pallas_src>

<mosaic_0001>
module attributes {stable_mosaic.version = 11 : i64} {
  func.func @_channel_attention_kernel(%arg0: i32, %arg1: memref<2x64x256xf32, #tpu.memory_space<vmem>>, %arg2: memref<64x4xf32, #tpu.memory_space<vmem>>, %arg3: memref<4x64xf32, #tpu.memory_space<vmem>>, %arg4: memref<2x64x256xf32, #tpu.memory_space<vmem>>) attributes {dimension_semantics = [#tpu.dimension_semantics<parallel>], iteration_bounds = array<i64: 2>, scalar_prefetch = 0 : i64, scratch_operands = 0 : i64, tpu.core_type = #tpu.core_type<tc>, window_params = [{transform_indices = @transform_0, window_bounds = array<i64: 2, 64, 256>}, {pipeline_mode = #tpu.pipeline_mode<synchronous>, transform_indices = @transform_1, window_bounds = array<i64: 64, 4>}, {pipeline_mode = #tpu.pipeline_mode<synchronous>, transform_indices = @transform_2, window_bounds = array<i64: 4, 64>}, {transform_indices = @transform_3, window_bounds = array<i64: 2, 64, 256>}]} {
    %c0 = arith.constant 0 : index
    %c0_0 = arith.constant 0 : index
    %c0_1 = arith.constant 0 : index
    %0 = vector.load %arg1[%c0, %c0_0, %c0_1] : memref<2x64x256xf32, #tpu.memory_space<vmem>>, vector<2x64x256xf32>
    %cst = arith.constant dense<0.000000e+00> : vector<2x64xf32>
    %1 = vector.multi_reduction <add>, %0, %cst [2] : vector<2x64x256xf32> to vector<2x64xf32>
    %cst_2 = arith.constant 3.906250e-03 : f32
    %2 = vector.broadcast %cst_2 : f32 to vector<2x64xf32>
    %3 = arith.mulf %1, %2 : vector<2x64xf32>
    %cst_3 = arith.constant dense<0xFF800000> : vector<2x64xf32>
    %4 = vector.multi_reduction <maximumf>, %0, %cst_3 [2] : vector<2x64x256xf32> to vector<2x64xf32>
    %c0_4 = arith.constant 0 : index
    %c0_5 = arith.constant 0 : index
    %5 = vector.load %arg2[%c0_4, %c0_5] : memref<64x4xf32, #tpu.memory_space<vmem>>, vector<64x4xf32>
    %c0_6 = arith.constant 0 : index
    %c0_7 = arith.constant 0 : index
    %6 = vector.load %arg3[%c0_6, %c0_7] : memref<4x64xf32, #tpu.memory_space<vmem>>, vector<4x64xf32>
    %7 = tpu.concatenate %3, %4 in 0 : vector<2x64xf32>, vector<2x64xf32> -> vector<4x64xf32>
    %cst_8 = arith.constant dense<0.000000e+00> : vector<4x4xf32>
    %8 = tpu.matmul %7, %5, %cst_8 {dimension_numbers = #tpu.dot_dimension_numbers<[1], [0], [0], [1], [0, 0, 1, 1], [], []>} : vector<4x64xf32>, vector<64x4xf32>, vector<4x4xf32> -> vector<4x4xf32>
    %cst_9 = arith.constant 0.000000e+00 : f32
    %9 = vector.broadcast %cst_9 : f32 to vector<4x4xf32>
    %10 = arith.maximumf %8, %9 : vector<4x4xf32>
    %cst_10 = arith.constant dense<0.000000e+00> : vector<4x64xf32>
    %11 = tpu.matmul %10, %6, %cst_10 {dimension_numbers = #tpu.dot_dimension_numbers<[1], [0], [0], [1], [0, 0, 1, 1], [], []>} : vector<4x4xf32>, vector<4x64xf32>, vector<4x64xf32> -> vector<4x64xf32>
    %12 = vector.extract_strided_slice %11 {offsets = [0, 0], sizes = [2, 64], strides = [1, 1]} : vector<4x64xf32> to vector<2x64xf32>
    %13 = vector.extract_strided_slice %11 {offsets = [2, 0], sizes = [2, 64], strides = [1, 1]} : vector<4x64xf32> to vector<2x64xf32>
    %14 = arith.addf %12, %13 : vector<2x64xf32>
    %15 = arith.negf %14 : vector<2x64xf32>
    %16 = math.exp %15 : vector<2x64xf32>
    %cst_11 = arith.constant 1.000000e+00 : f32
    %17 = vector.broadcast %cst_11 : f32 to vector<2x64xf32>
    %18 = arith.addf %17, %16 : vector<2x64xf32>
    %19 = arith.divf %17, %18 : vector<2x64xf32>
    %cst_12 = arith.constant 1.000000e+00 : f32
    %20 = vector.broadcast %cst_12 : f32 to vector<2x64xf32>
    %21 = arith.addf %20, %19 : vector<2x64xf32>
    %22 = vector.shape_cast %21 : vector<2x64xf32> to vector<2x64x1xf32>
    %c0_13 = arith.constant 0 : index
    %c0_14 = arith.constant 0 : index
    %c0_15 = arith.constant 0 : index
    %23 = vector.load %arg1[%c0_13, %c0_14, %c0_15] : memref<2x64x256xf32, #tpu.memory_space<vmem>>, vector<2x64x256xf32>
    %24 = vector.broadcast %22 : vector<2x64x1xf32> to vector<2x64x256xf32>
    %25 = arith.mulf %23, %24 : vector<2x64x256xf32>
    %c0_16 = arith.constant 0 : index
    %c0_17 = arith.constant 0 : index
    %c0_18 = arith.constant 0 : index
    %26 = vector.load %arg4[%c0_16, %c0_17, %c0_18] : memref<2x64x256xf32, #tpu.memory_space<vmem>>, vector<2x64x256xf32>
    tpu.vector_store %arg4[%c0_16, %c0_17, %c0_18], %25 {strides = array<i32>} : memref<2x64x256xf32, #tpu.memory_space<vmem>>, vector<2x64x256xf32>,
    return
  }
  func.func @transform_0(%arg0: i32) -> (i32, i32, i32) {
    %c0_i32 = arith.constant 0 : i32
    %c0_i32_0 = arith.constant 0 : i32
    %c0_i32_1 = arith.constant 0 : i32
    return %arg0, %c0_i32, %c0_i32_0 : i32, i32, i32
  }
  func.func @transform_1(%arg0: i32) -> (i32, i32) {
    %c0_i32 = arith.constant 0 : i32
    %c0_i32_0 = arith.constant 0 : i32
    %c0_i32_1 = arith.constant 0 : i32
    return %c0_i32, %c0_i32_0 : i32, i32
  }
  func.func @transform_2(%arg0: i32) -> (i32, i32) {
    %c0_i32 = arith.constant 0 : i32
    %c0_i32_0 = arith.constant 0 : i32
    %c0_i32_1 = arith.constant 0 : i32
    return %c0_i32, %c0_i32_0 : i32, i32
  }
  func.func @transform_3(%arg0: i32) -> (i32, i32, i32) {
    %c0_i32 = arith.constant 0 : i32
    %c0_i32_0 = arith.constant 0 : i32
    %c0_i32_1 = arith.constant 0 : i32
    return %arg0, %c0_i32, %c0_i32_0 : i32, i32, i32
  }
}

</mosaic_0001>

<llo_original>
// kernel: tpu_custom_call.1
$region0: #{tpu_custom_call.1}
  #allocation0 [shape = 'u32[]', space=smem, size = 0x4, offset = 0x4, fixed_abs, tag = 'smem constant byte address 0x4 - core index']
  #allocation1 [shape = 'u32[144,128]{1,0:T(1,128)}', space=vmem, size = 0x12000, scoped, tag = 'internal scratch']
  %s0 = inlined_call_operand.hbm [shape: f32[4,64,256], index: 0, kind: input, shape index: {}]
  %s1 = inlined_call_operand.vmem [shape: f32[64,4], index: 1, kind: input, shape index: {}]
  %s2 = inlined_call_operand.vmem [shape: f32[4,64], index: 2, kind: input, shape index: {}]
  %s3 = inlined_call_operand.hbm [shape: f32[4,64,256], index: 3, kind: output, shape index: {}]
  %s4 = sld [smem:[#allocation0]]
  $region49: #{tpu_custom_call.1} parent=0
    _
  %s6 = ssub.s32 1, %s4
  %s7 = scalar_select 0, %s6, %s4
  $region1: #{tpu_custom_call.1} parent=0
    #allocation2 [shape = 'u8[262144]{0}', space=vmem, size = 0x40000, scoped, tag = 'input window, operand 0']
    #allocation3 [shape = 's32[2]{0}', space=sflag, size = 0x8, scoped, tag = 'scoped memory for tpu_custom_call.1']
    #allocation4 [shape = 's32[2]{0}', space=sflag, size = 0x8, scoped, tag = 'scoped memory for tpu_custom_call.1']
    #allocation5 [shape = 'u8[262144]{0}', space=vmem, size = 0x40000, scoped, tag = 'output window, operand 0']
    %8 = vsyncpa [#allocation3], 0
    %s9 = scalar_lea.sflag [#allocation3], 1
    %10 = vsyncpa %s9, 0
    %11 = vsyncpa [#allocation4], 0
    %s12 = scalar_lea.sflag [#allocation4], 1
    %13 = vsyncpa %s12, 0
    loop: start=0, step=1, limit=4
    $region2: #{tpu_custom_call.1} parent=1 // loop_pre_header
      _
    $region3: #{tpu_custom_call.1} parent=1 // loop_header
      %s15 = sphi 0, %s19
      %p16 = scmp.ge.s32.totalorder %s15, 4
      %s25 = sphi 0, %s27
      %s28 = sphi 0, %s25
      %s29 = sphi 0, %s28
      %s45 = sphi 0, %s29
      %s49 = sphi 0, %s49
      %s51 = sphi 0, %s49
      %s52 = sphi 0, %s51
      %s66 = sphi 0, %s52
      %s70 = sphi 0, %s70
      %s72 = sphi 0, %s70
      %s73 = sphi 0, %s72
      %s87 = sphi 0, %s73
      %s93 = sphi 0, %s95
      %s96 = sphi 0, %s93
      %s97 = sphi 0, %s96
      %s113 = sphi 0, %s97
    $region4: #{tpu_custom_call.1} parent=1 // loop_header_branch
      %18 = sbr.rel (%p16) target = $region8
    $region5: #{tpu_custom_call.1} parent=1 // loop_body
      %s20 = ssub.s32 %s15, 1
      %s21 = ssub.s32 %s15, 2
      %s22 = sadd.s32 %s15, 1
      %s23 = ssub.s32 %s15, %s22
      %p24 = scmp.eq.s32.totalorder %s23, 0
      %s26 = sadd.s32 %s25, 1
      %s27 = scalar_select %p24, %s25, %s26
      %p30 = pneg %p24
      %p31 = scmp.eq.s32.totalorder %s15, 1
      %p32 = por %p30, %p31
      %p33 = scmp.ne.s32.totalorder %s25, %s28
      %p34 = scmp.eq.s32.totalorder %s15, 0
      %p35 = por %p33, %p34
      %p36 = scmp.ne.s32.totalorder %s25, %s28
      %p37 = scmp.eq.s32.totalorder %s20, 1
      %p38 = por %p36, %p37
      %p39 = scmp.ne.s32.totalorder %s28, %s29
      %p40 = scmp.eq.s32.totalorder %s20, 0
      %p41 = por %p39, %p40
      %p42 = scmp.ne.s32.totalorder %s28, %s29
      %p43 = scmp.eq.s32.totalorder %s21, 1
      %p44 = por %p42, %p43
      %p46 = scmp.ne.s32.totalorder %s29, %s45
      %p47 = scmp.eq.s32.totalorder %s21, 0
      %p48 = por %p46, %p47
      %s50 = sadd.s32 %s49, 1
      %p53 = scmp.eq.s32.totalorder %s15, 1
      %p54 = scmp.ne.s32.totalorder %s49, %s51
      %p55 = scmp.eq.s32.totalorder %s15, 0
      %p56 = por %p54, %p55
      %p57 = scmp.ne.s32.totalorder %s49, %s51
      %p58 = scmp.eq.s32.totalorder %s20, 1
      %p59 = por %p57, %p58
      %p60 = scmp.ne.s32.totalorder %s51, %s52
      %p61 = scmp.eq.s32.totalorder %s20, 0
      %p62 = por %p60, %p61
      %p63 = scmp.ne.s32.totalorder %s51, %s52
      %p64 = scmp.eq.s32.totalorder %s21, 1
      %p65 = por %p63, %p64
      %p67 = scmp.ne.s32.totalorder %s52, %s66
      %p68 = scmp.eq.s32.totalorder %s21, 0
      %p69 = por %p67, %p68
      %s71 = sadd.s32 %s70, 1
      %p74 = scmp.eq.s32.totalorder %s15, 1
      %p75 = scmp.ne.s32.totalorder %s70, %s72
      %p76 = scmp.eq.s32.totalorder %s15, 0
      %p77 = por %p75, %p76
      %p78 = scmp.ne.s32.totalorder %s70, %s72
      %p79 = scmp.eq.s32.totalorder %s20, 1
      %p80 = por %p78, %p79
      %p81 = scmp.ne.s32.totalorder %s72, %s73
      %p82 = scmp.eq.s32.totalorder %s20, 0
      %p83 = por %p81, %p82
      %p84 = scmp.ne.s32.totalorder %s72, %s73
      %p85 = scmp.eq.s32.totalorder %s21, 1
      %p86 = por %p84, %p85
      %p88 = scmp.ne.s32.totalorder %s73, %s87
      %p89 = scmp.eq.s32.totalorder %s21, 0
      %p90 = por %p88, %p89
      %s91 = ssub.s32 %s15, %s22
      %p92 = scmp.eq.s32.totalorder %s91, 0
      %s94 = sadd.s32 %s93, 1
      %s95 = scalar_select %p92, %s93, %s94
      %p98 = pneg %p92
      %p99 = scmp.eq.s32.totalorder %s15, 1
      %p100 = por %p98, %p99
      %p101 = scmp.ne.s32.totalorder %s93, %s96
      %p102 = scmp.eq.s32.totalorder %s15, 0
      %p103 = por %p101, %p102
      %p104 = scmp.ne.s32.totalorder %s93, %s96
      %p105 = scmp.eq.s32.totalorder %s20, 1
      %p106 = por %p104, %p105
      %p107 = scmp.ne.s32.totalorder %s96, %s97
      %p108 = scmp.eq.s32.totalorder %s20, 0
      %p109 = por %p107, %p108
      %p110 = scmp.ne.s32.totalorder %s96, %s97
      %p111 = scmp.eq.s32.totalorder %s21, 1
      %p112 = por %p110, %p111
      %p114 = scmp.ne.s32.totalorder %s97, %s113
      %p115 = scmp.eq.s32.totalorder %s21, 0
      %p116 = por %p114, %p115
      %p117 = scmp.le.s32.totalorder 1, %s15
      %p118 = scmp.lt.s32.totalorder %s15, 3
      %p119 = pnand %p117, %p118
      %p120 = pneg %p119
      // Predicated region
      $region9: #{tpu_custom_call.1} parent=5 // pred_check
        _
      $region10: #{tpu_custom_call.1} parent=5 // pred_check_branch
        %122 = sbr.rel (%p119) target = $region12
      $region11: #{tpu_custom_call.1} parent=5 // pred_region
        %s123 = ssub.s32 %s15, 1
        // Predicated region
        $region13: #{tpu_custom_call.1} parent=11 // pred_check
          %p124 = pneg %p62
        $region14: #{tpu_custom_call.1} parent=11 // pred_check_branch
          %126 = sbr.rel (%p124) target = $region16
        $region15: #{tpu_custom_call.1} parent=11 // pred_region
          _
        $region16: #{tpu_custom_call.1} parent=11 // pred_fallthru
          _
        // Predicated region
        $region17: #{tpu_custom_call.1} parent=11 // pred_check
          %p127 = pneg %p83
        $region18: #{tpu_custom_call.1} parent=11 // pred_check_branch
          %129 = sbr.rel (%p127) target = $region20
        $region19: #{tpu_custom_call.1} parent=11 // pred_region
          _
        $region20: #{tpu_custom_call.1} parent=11 // pred_fallthru
          _
      $region12: #{tpu_custom_call.1} parent=5 // pred_fallthru
        _
      %p130 = scmp.lt.s32.totalorder %s15, 2
      // Predicated region
      $region21: #{tpu_custom_call.1} parent=5 // pred_check
        %p131 = pneg %p130
      $region22: #{tpu_custom_call.1} parent=5 // pred_check_branch
        %133 = sbr.rel (%p131) target = $region24
      $region23: #{tpu_custom_call.1} parent=5 // pred_region
        // Predicated region
        $region25: #{tpu_custom_call.1} parent=23 // pred_check
          %p134 = pneg %p35
        $region26: #{tpu_custom_call.1} parent=23 // pred_check_branch
          %136 = sbr.rel (%p134) target = $region28
        $region27: #{tpu_custom_call.1} parent=23 // pred_region
          %s137 = sand.u32 %s25, 1
          %s138 = scalar_lea.sflag [#allocation3], %s137
          %s139 = sand.u32 %s25, 1
          %s140 = smul.addr %s139, 256
          %s141 = scalar_lea.vmem [#allocation2], %s140
          %s142 = smul.u32 2, %s15
          %s144 = ssub.s32 4096, 4096
          %145 = vsyncadd %s138, %s144
          %s146 = smul.addr %s142, 16
          %s147 = smul.addr %s146, 128
          %s148 = scalar_lea.hbm %s0, %s147
          %s149 = sshll.u32 %s141, 4
          %s150 = int_to_ptr.vmem [resolvable:$true] %s149
          %155 = dma.hbm_to_vmem [thread:$0]  %s148, 4096, %s150, %s138, 256, 256, 16
        $region28: #{tpu_custom_call.1} parent=23 // pred_fallthru
          _
      $region24: #{tpu_custom_call.1} parent=5 // pred_fallthru
        _
      %p156 = scmp.le.s32.totalorder 1, %s15
      %p157 = scmp.lt.s32.totalorder %s15, 3
      %p158 = pnand %p156, %p157
      %p159 = pneg %p158
      // Predicated region
      $region29: #{tpu_custom_call.1} parent=5 // pred_check
        _
      $region30: #{tpu_custom_call.1} parent=5 // pred_check_branch
        %161 = sbr.rel (%p158) target = $region32
      $region31: #{tpu_custom_call.1} parent=5 // pred_region
        %s162 = ssub.s32 %s15, 1
        %s163 = sand.u32 %s28, 1
        %s164 = scalar_lea.sflag [#allocation3], %s163
        %s165 = sand.u32 %s28, 1
        %s166 = smul.addr %s165, 256
        %s167 = scalar_lea.vmem [#allocation2], %s166
        // Predicated region
        $region33: #{tpu_custom_call.1} parent=31 // pred_check
          %p168 = pneg %p41
        $region34: #{tpu_custom_call.1} parent=31 // pred_check_branch
          %170 = sbr.rel (%p168) target = $region36
        $region35: #{tpu_custom_call.1} parent=31 // pred_region
          %171 = dma.done %s164, 4096
        $region36: #{tpu_custom_call.1} parent=31 // pred_fallthru
          _
        %s172 = sand.u32 %s28, 1
        %s173 = scalar_lea.sflag [#allocation3], %s172
        %s174 = sand.u32 %s28, 1
        %s175 = smul.addr %s174, 256
        %s176 = scalar_lea.vmem [#allocation2], %s175
        %p177 = pneg %p41
        %p178 = pneg %p38
        %p179 = pneg %p62
        %p180 = pneg %p59
        %p181 = pneg %p83
        %p182 = pneg %p80
        %p183 = pneg %p109
        %p184 = pneg %p106
        %s185 = sand.u32 %s96, 1
        %s186 = scalar_lea.sflag [#allocation4], %s185
        %s187 = sand.u32 %s96, 1
        %s188 = smul.addr %s187, 256
        %s189 = scalar_lea.vmem [#allocation5], %s188
        %s190 = smul.u32 2, %s20
        %s191 = smul.u32 2, %s20
        %v192 = vld [vmem:[%s167] sm:$0xff]
        %v193 = vld [vmem:[%s167 + $0x8] sm:$0xff]
        %v194 = vld [vmem:[%s167 + $0x10] sm:$0xff]
        %v195 = vld [vmem:[%s167 + $0x18] sm:$0xff]
        %v196 = vld [vmem:[%s167 + $0x20] sm:$0xff]
        %v197 = vld [vmem:[%s167 + $0x28] sm:$0xff]
        %v198 = vld [vmem:[%s167 + $0x30] sm:$0xff]
        %v199 = vld [vmem:[%s167 + $0x38] sm:$0xff]
        %v200 = vld [vmem:[%s167 + $0x40] sm:$0xff]
        %v201 = vld [vmem:[%s167 + $0x48] sm:$0xff]
        %v202 = vld [vmem:[%s167 + $0x50] sm:$0xff]
        %v203 = vld [vmem:[%s167 + $0x58] sm:$0xff]
        %v204 = vld [vmem:[%s167 + $0x60] sm:$0xff]
        %v205 = vld [vmem:[%s167 + $0x68] sm:$0xff]
        %v206 = vld [vmem:[%s167 + $0x70] sm:$0xff]
        %v207 = vld [vmem:[%s167 + $0x78] sm:$0xff]
        %v208 = vld [vmem:[%s167 + $0x80] sm:$0xff]
        %v209 = vld [vmem:[%s167 + $0x88] sm:$0xff]
        %v210 = vld [vmem:[%s167 + $0x90] sm:$0xff]
        %v211 = vld [vmem:[%s167 + $0x98] sm:$0xff]
        %v212 = vld [vmem:[%s167 + $0xa0] sm:$0xff]
        %v213 = vld [vmem:[%s167 + $0xa8] sm:$0xff]
        %v214 = vld [vmem:[%s167 + $0xb0] sm:$0xff]
        %v215 = vld [vmem:[%s167 + $0xb8] sm:$0xff]
        %v216 = vld [vmem:[%s167 + $0xc0] sm:$0xff]
        %v217 = vld [vmem:[%s167 + $0xc8] sm:$0xff]
        %v218 = vld [vmem:[%s167 + $0xd0] sm:$0xff]
        %v219 = vld [vmem:[%s167 + $0xd8] sm:$0xff]
        %v220 = vld [vmem:[%s167 + $0xe0] sm:$0xff]
        %v221 = vld [vmem:[%s167 + $0xe8] sm:$0xff]
        %v222 = vld [vmem:[%s167 + $0xf0] sm:$0xff]
        %v223 = vld [vmem:[%s167 + $0xf8] sm:$0xff]
        %v224 = vadd.f32 %v192, %v193
        %225 = vadd.xlane.f32.xlu0 %v224
        %v226 = vpop.xlane.xlu0 %225
        %v227 = vadd.f32 %v194, %v195
        %228 = vadd.xlane.f32.xlu0 %v227
        %v229 = vpop.xlane.xlu0 %228
        %v230 = vadd.f32 %v196, %v197
        %231 = vadd.xlane.f32.xlu0 %v230
        %v232 = vpop.xlane.xlu0 %231
        %v233 = vadd.f32 %v198, %v199
        %234 = vadd.xlane.f32.xlu0 %v233
        %v235 = vpop.xlane.xlu0 %234
        %v236 = vadd.f32 %v200, %v201
        %237 = vadd.xlane.f32.xlu0 %v236
        %v238 = vpop.xlane.xlu0 %237
        %v239 = vadd.f32 %v202, %v203
        %240 = vadd.xlane.f32.xlu0 %v239
        %v241 = vpop.xlane.xlu0 %240
        %v242 = vadd.f32 %v204, %v205
        %243 = vadd.xlane.f32.xlu0 %v242
        %v244 = vpop.xlane.xlu0 %243
        %v245 = vadd.f32 %v206, %v207
        %246 = vadd.xlane.f32.xlu0 %v245
        %v247 = vpop.xlane.xlu0 %246
        %v248 = vadd.f32 %v208, %v209
        %249 = vadd.xlane.f32.xlu0 %v248
        %v250 = vpop.xlane.xlu0 %249
        %v251 = vadd.f32 %v210, %v211
        %252 = vadd.xlane.f32.xlu0 %v251
        %v253 = vpop.xlane.xlu0 %252
        %v254 = vadd.f32 %v212, %v213
        %255 = vadd.xlane.f32.xlu0 %v254
        %v256 = vpop.xlane.xlu0 %255
        %v257 = vadd.f32 %v214, %v215
        %258 = vadd.xlane.f32.xlu0 %v257
        %v259 = vpop.xlane.xlu0 %258
        %v260 = vadd.f32 %v216, %v217
        %261 = vadd.xlane.f32.xlu0 %v260
        %v262 = vpop.xlane.xlu0 %261
        %v263 = vadd.f32 %v218, %v219
        %264 = vadd.xlane.f32.xlu0 %v263
        %v265 = vpop.xlane.xlu0 %264
        %v266 = vadd.f32 %v220, %v221
        %267 = vadd.xlane.f32.xlu0 %v266
        %v268 = vpop.xlane.xlu0 %267
        %v269 = vadd.f32 %v222, %v223
        %270 = vadd.xlane.f32.xlu0 %v269
        %v271 = vpop.xlane.xlu0 %270
        %v272 = vmul.f32 %v226, 0.00390625
        %v273 = vmul.f32 %v229, 0.00390625
        %v274 = vmul.f32 %v232, 0.00390625
        %v275 = vmul.f32 %v235, 0.00390625
        %v276 = vmul.f32 %v238, 0.00390625
        %v277 = vmul.f32 %v241, 0.00390625
        %v278 = vmul.f32 %v244, 0.00390625
        %v279 = vmul.f32 %v247, 0.00390625
        %v280 = vmul.f32 %v250, 0.00390625
        %v281 = vmul.f32 %v253, 0.00390625
        %v282 = vmul.f32 %v256, 0.00390625
        %v283 = vmul.f32 %v259, 0.00390625
        %v284 = vmul.f32 %v262, 0.00390625
        %v285 = vmul.f32 %v265, 0.00390625
        %v286 = vmul.f32 %v268, 0.00390625
        %v287 = vmul.f32 %v271, 0.00390625
        %v288 = vmax.f32 %v192, %v193
        %289 = vmax.xlane.f32.xlu0 %v288
        %v290 = vpop.xlane.xlu0 %289
        %v291 = vmax.f32 %v194, %v195
        %292 = vmax.xlane.f32.xlu0 %v291
        %v293 = vpop.xlane.xlu0 %292
        %v294 = vmax.f32 %v196, %v197
        %295 = vmax.xlane.f32.xlu0 %v294
        %v296 = vpop.xlane.xlu0 %295
        %v297 = vmax.f32 %v198, %v199
        %298 = vmax.xlane.f32.xlu0 %v297
        %v299 = vpop.xlane.xlu0 %298
        %v300 = vmax.f32 %v200, %v201
        %301 = vmax.xlane.f32.xlu0 %v300
        %v302 = vpop.xlane.xlu0 %301
        %v303 = vmax.f32 %v202, %v203
        %304 = vmax.xlane.f32.xlu0 %v303
        %v305 = vpop.xlane.xlu0 %304
        %v306 = vmax.f32 %v204, %v205
        %307 = vmax.xlane.f32.xlu0 %v306
        %v308 = vpop.xlane.xlu0 %307
        %v309 = vmax.f32 %v206, %v207
        %310 = vmax.xlane.f32.xlu0 %v309
        %v311 = vpop.xlane.xlu0 %310
        %v312 = vmax.f32 %v208, %v209
        %313 = vmax.xlane.f32.xlu0 %v312
        %v314 = vpop.xlane.xlu0 %313
        %v315 = vmax.f32 %v210, %v211
        %316 = vmax.xlane.f32.xlu0 %v315
        %v317 = vpop.xlane.xlu0 %316
        %v318 = vmax.f32 %v212, %v213
        %319 = vmax.xlane.f32.xlu0 %v318
        %v320 = vpop.xlane.xlu0 %319
        %v321 = vmax.f32 %v214, %v215
        %322 = vmax.xlane.f32.xlu0 %v321
        %v323 = vpop.xlane.xlu0 %322
        %v324 = vmax.f32 %v216, %v217
        %325 = vmax.xlane.f32.xlu0 %v324
        %v326 = vpop.xlane.xlu0 %325
        %v327 = vmax.f32 %v218, %v219
        %328 = vmax.xlane.f32.xlu0 %v327
        %v329 = vpop.xlane.xlu0 %328
        %v330 = vmax.f32 %v220, %v221
        %331 = vmax.xlane.f32.xlu0 %v330
        %v332 = vpop.xlane.xlu0 %331
        %v333 = vmax.f32 %v222, %v223
        %334 = vmax.xlane.f32.xlu0 %v333
        %v335 = vpop.xlane.xlu0 %334
        %v336 = vld [vmem:[%s1] sm:$0xff]
        %v337 = vld [vmem:[%s1 + $0x8] sm:$0xff]
        %v338 = vld [vmem:[%s1 + $0x10] sm:$0xff]
        %v339 = vld [vmem:[%s1 + $0x18] sm:$0xff]
        %v340 = vld [vmem:[%s1 + $0x20] sm:$0xff]
        %v341 = vld [vmem:[%s1 + $0x28] sm:$0xff]
        %v342 = vld [vmem:[%s1 + $0x30] sm:$0xff]
        %v343 = vld [vmem:[%s1 + $0x38] sm:$0xff]
        %v344 = vld [vmem:[%s2] sm:$0xf]
        %v361 = vlaneseq
        %v362 = vand.u32 %v361, 127
        %v363 = vlaneseq
        %v364 = vshrl.u32 %v363, 7
        %v365 = vsub.s32 %v362, %v364
        %v366 = vrot.slane %v272, %v365
        %v367 = vadd.s32 %v362, 4294967288
        %v368 = vlaneseq
        %v369 = vshrl.u32 %v368, 7
        %v370 = vsub.s32 %v367, %v369
        %v371 = vrot.slane %v273, %v370
        %vm372 = vcmask 130112
        %v373 = vsel %vm372, %v371, %v366
        %v374 = vadd.s32 %v362, 4294967280
        %v375 = vlaneseq
        %v376 = vshrl.u32 %v375, 7
        %v377 = vsub.s32 %v374, %v376
        %v378 = vrot.slane %v274, %v377
        %vm379 = vcmask 195712
        %v380 = vsel %vm379, %v378, %v373
        %v381 = vadd.s32 %v362, 4294967272
        %v382 = vlaneseq
        %v383 = vshrl.u32 %v382, 7
        %v384 = vsub.s32 %v381, %v383
        %v385 = vrot.slane %v275, %v384
        %vm386 = vcmask 261312
        %v387 = vsel %vm386, %v385, %v380
        %v388 = vadd.s32 %v362, 4294967264
        %v389 = vlaneseq
        %v390 = vshrl.u32 %v389, 7
        %v391 = vsub.s32 %v388, %v390
        %v392 = vrot.slane %v276, %v391
        %vm393 = vcmask 326912
        %v394 = vsel %vm393, %v392, %v387
        %v395 = vadd.s32 %v362, 4294967256
        %v396 = vlaneseq
        %v397 = vshrl.u32 %v396, 7
        %v398 = vsub.s32 %v395, %v397
        %v399 = vrot.slane %v277, %v398
        %vm400 = vcmask 392512
        %v401 = vsel %vm400, %v399, %v394
        %v402 = vadd.s32 %v362, 4294967248
        %v403 = vlaneseq
        %v404 = vshrl.u32 %v403, 7
        %v405 = vsub.s32 %v402, %v404
        %v406 = vrot.slane %v278, %v405
        %vm407 = vcmask 458112
        %v408 = vsel %vm407, %v406, %v401
        %v409 = vadd.s32 %v362, 4294967240
        %v410 = vlaneseq
        %v411 = vshrl.u32 %v410, 7
        %v412 = vsub.s32 %v409, %v411
        %v413 = vrot.slane %v279, %v412
        %vm414 = vcmask 523712
        %v415 = vsel %vm414, %v413, %v408
        %v416 = vlaneseq
        %v417 = vshrl.u32 %v416, 7
        %v418 = vsub.s32 %v362, %v417
        %v419 = vrot.slane %v280, %v418
        %v420 = vlaneseq
        %v421 = vshrl.u32 %v420, 7
        %v422 = vsub.s32 %v367, %v421
        %v423 = vrot.slane %v281, %v422
        %v424 = vsel %vm372, %v423, %v419
        %v425 = vlaneseq
        %v426 = vshrl.u32 %v425, 7
        %v427 = vsub.s32 %v374, %v426
        %v428 = vrot.slane %v282, %v427
        %v429 = vsel %vm379, %v428, %v424
        %v430 = vlaneseq
        %v431 = vshrl.u32 %v430, 7
        %v432 = vsub.s32 %v381, %v431
        %v433 = vrot.slane %v283, %v432
        %v434 = vsel %vm386, %v433, %v429
        %v435 = vlaneseq
        %v436 = vshrl.u32 %v435, 7
        %v437 = vsub.s32 %v388, %v436
        %v438 = vrot.slane %v284, %v437
        %v439 = vsel %vm393, %v438, %v434
        %v440 = vlaneseq
        %v441 = vshrl.u32 %v440, 7
        %v442 = vsub.s32 %v395, %v441
        %v443 = vrot.slane %v285, %v442
        %v444 = vsel %vm400, %v443, %v439
        %v445 = vlaneseq
        %v446 = vshrl.u32 %v445, 7
        %v447 = vsub.s32 %v402, %v446
        %v448 = vrot.slane %v286, %v447
        %v449 = vsel %vm407, %v448, %v444
        %v450 = vlaneseq
        %v451 = vshrl.u32 %v450, 7
        %v452 = vsub.s32 %v409, %v451
        %v453 = vrot.slane %v287, %v452
        %v454 = vsel %vm414, %v453, %v449
        %vm455 = vcmask 1041409
        %v456 = vsel %vm455, %v454, %v415
        %v474 = vlaneseq
        %v475 = vshrl.u32 %v474, 7
        %v476 = vsub.s32 %v362, %v475
        %v477 = vrot.slane %v290, %v476
        %v478 = vlaneseq
        %v479 = vshrl.u32 %v478, 7
        %v480 = vsub.s32 %v367, %v479
        %v481 = vrot.slane %v293, %v480
        %v482 = vsel %vm372, %v481, %v477
        %v483 = vlaneseq
        %v484 = vshrl.u32 %v483, 7
        %v485 = vsub.s32 %v374, %v484
        %v486 = vrot.slane %v296, %v485
        %v487 = vsel %vm379, %v486, %v482
        %v488 = vlaneseq
        %v489 = vshrl.u32 %v488, 7
        %v490 = vsub.s32 %v381, %v489
        %v491 = vrot.slane %v299, %v490
        %v492 = vsel %vm386, %v491, %v487
        %v493 = vlaneseq
        %v494 = vshrl.u32 %v493, 7
        %v495 = vsub.s32 %v388, %v494
        %v496 = vrot.slane %v302, %v495
        %v497 = vsel %vm393, %v496, %v492
        %v498 = vlaneseq
        %v499 = vshrl.u32 %v498, 7
        %v500 = vsub.s32 %v395, %v499
        %v501 = vrot.slane %v305, %v500
        %v502 = vsel %vm400, %v501, %v497
        %v503 = vlaneseq
        %v504 = vshrl.u32 %v503, 7
        %v505 = vsub.s32 %v402, %v504
        %v506 = vrot.slane %v308, %v505
        %v507 = vsel %vm407, %v506, %v502
        %v508 = vlaneseq
        %v509 = vshrl.u32 %v508, 7
        %v510 = vsub.s32 %v409, %v509
        %v511 = vrot.slane %v311, %v510
        %v512 = vsel %vm414, %v511, %v507
        %v513 = vlaneseq
        %v514 = vshrl.u32 %v513, 7
        %v515 = vsub.s32 %v362, %v514
        %v516 = vrot.slane %v314, %v515
        %v517 = vlaneseq
        %v518 = vshrl.u32 %v517, 7
        %v519 = vsub.s32 %v367, %v518
        %v520 = vrot.slane %v317, %v519
        %v521 = vsel %vm372, %v520, %v516
        %v522 = vlaneseq
        %v523 = vshrl.u32 %v522, 7
        %v524 = vsub.s32 %v374, %v523
        %v525 = vrot.slane %v320, %v524
        %v526 = vsel %vm379, %v525, %v521
        %v527 = vlaneseq
        %v528 = vshrl.u32 %v527, 7
        %v529 = vsub.s32 %v381, %v528
        %v530 = vrot.slane %v323, %v529
        %v531 = vsel %vm386, %v530, %v526
        %v532 = vlaneseq
        %v533 = vshrl.u32 %v532, 7
        %v534 = vsub.s32 %v388, %v533
        %v535 = vrot.slane %v326, %v534
        %v536 = vsel %vm393, %v535, %v531
        %v537 = vlaneseq
        %v538 = vshrl.u32 %v537, 7
        %v539 = vsub.s32 %v395, %v538
        %v540 = vrot.slane %v329, %v539
        %v541 = vsel %vm400, %v540, %v536
        %v542 = vlaneseq
        %v543 = vshrl.u32 %v542, 7
        %v544 = vsub.s32 %v402, %v543
        %v545 = vrot.slane %v332, %v544
        %v546 = vsel %vm407, %v545, %v541
        %v547 = vlaneseq
        %v548 = vshrl.u32 %v547, 7
        %v549 = vsub.s32 %v409, %v548
        %v550 = vrot.slane %v335, %v549
        %v551 = vsel %vm414, %v550, %v546
        %vm552 = vcmask 1043459
        %v553 = vsel %vm552, %v551, %v512
        %vm555 = vcmask 1041408
        %v556 = vsel %vm555, %v456, %v553
        %vm557 = vcmask 523264
        %v559 = vsel %vm557, %v556, 0
        %561 = vmatprep.subr.mxu0 0.0
        %562 = vmatpush1.msra.mxu0 %v336
        %563 = vmatprep.subr.mxu0 0.0
        %564 = vmatpush1.msra.mxu0 %v337
        %565 = vmatprep.subr.mxu0 0.0
        %566 = vmatpush1.msra.mxu0 %v338
        %567 = vmatprep.subr.mxu0 0.0
        %568 = vmatpush1.msra.mxu0 %v339
        %569 = vmatprep.subr.mxu0 0.0
        %570 = vmatpush1.msra.mxu0 %v340
        %571 = vmatprep.subr.mxu0 0.0
        %572 = vmatpush1.msra.mxu0 %v341
        %573 = vmatprep.subr.mxu0 0.0
        %574 = vmatpush1.msra.mxu0 %v342
        %575 = vmatprep.subr.mxu0 0.0
        %576 = vmatpush1.msra.mxu0 %v343
        %577 = vmatprep.subr.mxu0 0.0
        %578 = vmatpush1.msra.mxu0 0.0
        %579 = vmatprep.subr.mxu0 0.0
        %580 = vmatpush1.msra.mxu0 0.0
        %581 = vmatprep.subr.mxu0 0.0
        %582 = vmatpush1.msra.mxu0 0.0
        %583 = vmatprep.subr.mxu0 0.0
        %584 = vmatpush1.msra.mxu0 0.0
        %585 = vmatprep.subr.mxu0 0.0
        %586 = vmatpush1.msra.mxu0 0.0
        %587 = vmatprep.subr.mxu0 0.0
        %588 = vmatpush1.msra.mxu0 0.0
        %589 = vmatprep.subr.mxu0 0.0
        %590 = vmatpush1.msra.mxu0 0.0
        %591 = vmatprep.subr.mxu0 0.0
        %592 = vmatpush1.msra.mxu0 0.0
        %593 = vmatprep.subr.mxu0 0.0
        %594 = vmatpush1.msra.mxu0 0.0
        %595 = vmatprep.subr.mxu0 0.0
        %596 = vmatpush1.msra.mxu0 0.0
        %597 = vmatprep.subr.mxu0 0.0
        %598 = vmatpush1.msra.mxu0 0.0
        %599 = vmatprep.subr.mxu0 0.0
        %600 = vmatpush1.msra.mxu0 0.0
        %601 = vmatprep.subr.mxu0 0.0
        %602 = vmatpush1.msra.mxu0 0.0
        %603 = vmatprep.subr.mxu0 0.0
        %604 = vmatpush1.msra.mxu0 0.0
        %605 = vmatprep.subr.mxu0 0.0
        %606 = vmatpush1.msra.mxu0 0.0
        %607 = vmatprep.subr.mxu0 0.0
        %608 = vmatpush1.msra.mxu0 0.0
        %609 = vmatprep.subr.mxu0 0.0
        %610 = vmatpush1.msra.mxu0 0.0
        %611 = vmatprep.subr.mxu0 0.0
        %612 = vmatpush1.msra.mxu0 0.0
        %613 = vmatprep.subr.mxu0 0.0
        %614 = vmatpush1.msra.mxu0 0.0
        %615 = vmatprep.subr.mxu0 0.0
        %616 = vmatpush1.msra.mxu0 0.0
        %617 = vmatprep.subr.mxu0 0.0
        %618 = vmatpush1.msra.mxu0 0.0
        %619 = vmatprep.subr.mxu0 0.0
        %620 = vmatpush1.msra.mxu0 0.0
        %621 = vmatprep.subr.mxu0 0.0
        %622 = vmatpush1.msra.mxu0 0.0
        %623 = vmatprep.subr.mxu0 0.0
        %624 = vmatpush1.msra.mxu0 0.0
        %625 = vmatprep.mubr.f32.mxu0 0.0
        %626 = vmatmul.mubr.f32.gmra.mrb[0].mxu0 %v559
        %v627 = vpop.f32.mrb[0].mxu0
        %v628 = vadd.f32 0.0, %v627
        %v629 = vpop.f32.mrb[0].mxu0
        %630 = vdwg.mxu0
        %v631 = vmax.f32 %v628, 0.0
        %vm632 = vcmask 31744
        %v634 = vsel %vm632, %v631, 0
        %vm636 = vcmask 1043456
        %v638 = vsel %vm636, %v344, 0
        %640 = vmatprep.subr.mxu0 0.0
        %641 = vmatpush1.msra.mxu0 %v638
        %642 = vmatprep.subr.mxu0 0.0
        %643 = vmatpush1.msra.mxu0 0.0
        %644 = vmatprep.subr.mxu0 0.0
        %645 = vmatpush1.msra.mxu0 0.0
        %646 = vmatprep.subr.mxu0 0.0
        %647 = vmatpush1.msra.mxu0 0.0
        %648 = vmatprep.subr.mxu0 0.0
        %649 = vmatpush1.msra.mxu0 0.0
        %650 = vmatprep.subr.mxu0 0.0
        %651 = vmatpush1.msra.mxu0 0.0
        %652 = vmatprep.subr.mxu0 0.0
        %653 = vmatpush1.msra.mxu0 0.0
        %654 = vmatprep.subr.mxu0 0.0
        %655 = vmatpush1.msra.mxu0 0.0
        %656 = vmatprep.subr.mxu0 0.0
        %657 = vmatpush1.msra.mxu0 0.0
        %658 = vmatprep.subr.mxu0 0.0
        %659 = vmatpush1.msra.mxu0 0.0
        %660 = vmatprep.subr.mxu0 0.0
        %661 = vmatpush1.msra.mxu0 0.0
        %662 = vmatprep.subr.mxu0 0.0
        %663 = vmatpush1.msra.mxu0 0.0
        %664 = vmatprep.subr.mxu0 0.0
        %665 = vmatpush1.msra.mxu0 0.0
        %666 = vmatprep.subr.mxu0 0.0
        %667 = vmatpush1.msra.mxu0 0.0
        %668 = vmatprep.subr.mxu0 0.0
        %669 = vmatpush1.msra.mxu0 0.0
        %670 = vmatprep.subr.mxu0 0.0
        %671 = vmatpush1.msra.mxu0 0.0
        %672 = vmatprep.subr.mxu0 0.0
        %673 = vmatpush1.msra.mxu0 0.0
        %674 = vmatprep.subr.mxu0 0.0
        %675 = vmatpush1.msra.mxu0 0.0
        %676 = vmatprep.subr.mxu0 0.0
        %677 = vmatpush1.msra.mxu0 0.0
        %678 = vmatprep.subr.mxu0 0.0
        %679 = vmatpush1.msra.mxu0 0.0
        %680 = vmatprep.subr.mxu0 0.0
        %681 = vmatpush1.msra.mxu0 0.0
        %682 = vmatprep.subr.mxu0 0.0
        %683 = vmatpush1.msra.mxu0 0.0
        %684 = vmatprep.subr.mxu0 0.0
        %685 = vmatpush1.msra.mxu0 0.0
        %686 = vmatprep.subr.mxu0 0.0
        %687 = vmatpush1.msra.mxu0 0.0
        %688 = vmatprep.subr.mxu0 0.0
        %689 = vmatpush1.msra.mxu0 0.0
        %690 = vmatprep.subr.mxu0 0.0
        %691 = vmatpush1.msra.mxu0 0.0
        %692 = vmatprep.subr.mxu0 0.0
        %693 = vmatpush1.msra.mxu0 0.0
        %694 = vmatprep.subr.mxu0 0.0
        %695 = vmatpush1.msra.mxu0 0.0
        %696 = vmatprep.subr.mxu0 0.0
        %697 = vmatpush1.msra.mxu0 0.0
        %698 = vmatprep.subr.mxu0 0.0
        %699 = vmatpush1.msra.mxu0 0.0
        %700 = vmatprep.subr.mxu0 0.0
        %701 = vmatpush1.msra.mxu0 0.0
        %702 = vmatprep.subr.mxu0 0.0
        %703 = vmatpush1.msra.mxu0 0.0
        %704 = vmatprep.mubr.f32.mxu0 0.0
        %705 = vmatmul.mubr.f32.gmra.mrb[0].mxu0 %v634
        %v706 = vpop.f32.mrb[0].mxu0
        %v707 = vadd.f32 0.0, %v706
        %v708 = vpop.f32.mrb[0].mxu0
        %709 = vdwg.mxu0
        %v711 = vrot.slane %v707, 2
        %v713 = vadd.f32 %v707, %v711
        %v714 = vxor.u32 %v713, 2147483648
        %v715 = vmul.f32 %v714, 1.442695
        %v716 = vpow.pop %v715
        %v717 = vadd.f32 %v716, 1.0
        %v718 = vrcp.pop %v717
        %v719 = vmul.f32 1.0, %v718
        %v720 = vadd.f32 %v719, 1.0
        %v721 = vlaneseq
        %v722 = vshrl.u32 %v721, 7
        %v723 = vsub.s32 0, %v722
        %v724 = vrot.slane %v720, %v723
        %726 = vbcast.lane.b32.xlu0 %v724, 256
        %v727 = vpop.permute.xlu0 %726
        %s729 = sor.u32 256, 8
        %730 = vbcast.lane.b32.xlu0 %v724, %s729
        %v731 = vpop.permute.xlu0 %730
        %s733 = sor.u32 256, 16
        %734 = vbcast.lane.b32.xlu0 %v724, %s733
        %v735 = vpop.permute.xlu0 %734
        %s737 = sor.u32 256, 24
        %738 = vbcast.lane.b32.xlu0 %v724, %s737
        %v739 = vpop.permute.xlu0 %738
        %s741 = sor.u32 256, 32
        %742 = vbcast.lane.b32.xlu0 %v724, %s741
        %v743 = vpop.permute.xlu0 %742
        %s745 = sor.u32 256, 40
        %746 = vbcast.lane.b32.xlu0 %v724, %s745
        %v747 = vpop.permute.xlu0 %746
        %s749 = sor.u32 256, 48
        %750 = vbcast.lane.b32.xlu0 %v724, %s749
        %v751 = vpop.permute.xlu0 %750
        %s753 = sor.u32 256, 56
        %754 = vbcast.lane.b32.xlu0 %v724, %s753
        %v755 = vpop.permute.xlu0 %754
        %v756 = vlaneseq
        %v757 = vshrl.u32 %v756, 7
        %v758 = vsub.s32 1, %v757
        %v759 = vrot.slane %v720, %v758
        %761 = vbcast.lane.b32.xlu0 %v759, 256
        %v762 = vpop.permute.xlu0 %761
        %s764 = sor.u32 256, 8
        %765 = vbcast.lane.b32.xlu0 %v759, %s764
        %v766 = vpop.permute.xlu0 %765
        %s768 = sor.u32 256, 16
        %769 = vbcast.lane.b32.xlu0 %v759, %s768
        %v770 = vpop.permute.xlu0 %769
        %s772 = sor.u32 256, 24
        %773 = vbcast.lane.b32.xlu0 %v759, %s772
        %v774 = vpop.permute.xlu0 %773
        %s776 = sor.u32 256, 32
        %777 = vbcast.lane.b32.xlu0 %v759, %s776
        %v778 = vpop.permute.xlu0 %777
        %s780 = sor.u32 256, 40
        %781 = vbcast.lane.b32.xlu0 %v759, %s780
        %v782 = vpop.permute.xlu0 %781
        %s784 = sor.u32 256, 48
        %785 = vbcast.lane.b32.xlu0 %v759, %s784
        %v786 = vpop.permute.xlu0 %785
        %s788 = sor.u32 256, 56
        %789 = vbcast.lane.b32.xlu0 %v759, %s788
        %v790 = vpop.permute.xlu0 %789
        %v791 = vmul.f32 %v192, %v727
        %v792 = vmul.f32 %v193, %v727
        %v793 = vmul.f32 %v194, %v731
        %v794 = vmul.f32 %v195, %v731
        %v795 = vmul.f32 %v196, %v735
        %v796 = vmul.f32 %v197, %v735
        %v797 = vmul.f32 %v198, %v739
        %v798 = vmul.f32 %v199, %v739
        %v799 = vmul.f32 %v200, %v743
        %v800 = vmul.f32 %v201, %v743
        %v801 = vmul.f32 %v202, %v747
        %v802 = vmul.f32 %v203, %v747
        %v803 = vmul.f32 %v204, %v751
        %v804 = vmul.f32 %v205, %v751
        %v805 = vmul.f32 %v206, %v755
        %v806 = vmul.f32 %v207, %v755
        %v807 = vmul.f32 %v208, %v762
        %v808 = vmul.f32 %v209, %v762
        %v809 = vmul.f32 %v210, %v766
        %v810 = vmul.f32 %v211, %v766
        %v811 = vmul.f32 %v212, %v770
        %v812 = vmul.f32 %v213, %v770
        %v813 = vmul.f32 %v214, %v774
        %v814 = vmul.f32 %v215, %v774
        %v815 = vmul.f32 %v216, %v778
        %v816 = vmul.f32 %v217, %v778
        %v817 = vmul.f32 %v218, %v782
        %v818 = vmul.f32 %v219, %v782
        %v819 = vmul.f32 %v220, %v786
        %v820 = vmul.f32 %v221, %v786
        %v821 = vmul.f32 %v222, %v790
        %v822 = vmul.f32 %v223, %v790
        %823 = vst [vmem:[%s189] sm:$0xff] %v791
        %824 = vst [vmem:[%s189 + $0x8] sm:$0xff] %v792
        %825 = vst [vmem:[%s189 + $0x10] sm:$0xff] %v793
        %826 = vst [vmem:[%s189 + $0x18] sm:$0xff] %v794
        %827 = vst [vmem:[%s189 + $0x20] sm:$0xff] %v795
        %828 = vst [vmem:[%s189 + $0x28] sm:$0xff] %v796
        %829 = vst [vmem:[%s189 + $0x30] sm:$0xff] %v797
        %830 = vst [vmem:[%s189 + $0x38] sm:$0xff] %v798
        %831 = vst [vmem:[%s189 + $0x40] sm:$0xff] %v799
        %832 = vst [vmem:[%s189 + $0x48] sm:$0xff] %v800
        %833 = vst [vmem:[%s189 + $0x50] sm:$0xff] %v801
        %834 = vst [vmem:[%s189 + $0x58] sm:$0xff] %v802
        %835 = vst [vmem:[%s189 + $0x60] sm:$0xff] %v803
        %836 = vst [vmem:[%s189 + $0x68] sm:$0xff] %v804
        %837 = vst [vmem:[%s189 + $0x70] sm:$0xff] %v805
        %838 = vst [vmem:[%s189 + $0x78] sm:$0xff] %v806
        %839 = vst [vmem:[%s189 + $0x80] sm:$0xff] %v807
        %840 = vst [vmem:[%s189 + $0x88] sm:$0xff] %v808
        %841 = vst [vmem:[%s189 + $0x90] sm:$0xff] %v809
        %842 = vst [vmem:[%s189 + $0x98] sm:$0xff] %v810
        %843 = vst [vmem:[%s189 + $0xa0] sm:$0xff] %v811
        %844 = vst [vmem:[%s189 + $0xa8] sm:$0xff] %v812
        %845 = vst [vmem:[%s189 + $0xb0] sm:$0xff] %v813
        %846 = vst [vmem:[%s189 + $0xb8] sm:$0xff] %v814
        %847 = vst [vmem:[%s189 + $0xc0] sm:$0xff] %v815
        %848 = vst [vmem:[%s189 + $0xc8] sm:$0xff] %v816
        %849 = vst [vmem:[%s189 + $0xd0] sm:$0xff] %v817
        %850 = vst [vmem:[%s189 + $0xd8] sm:$0xff] %v818
        %851 = vst [vmem:[%s189 + $0xe0] sm:$0xff] %v819
        %852 = vst [vmem:[%s189 + $0xe8] sm:$0xff] %v820
        %853 = vst [vmem:[%s189 + $0xf0] sm:$0xff] %v821
        %854 = vst [vmem:[%s189 + $0xf8] sm:$0xff] %v822
        %s855 = sand.u32 %s96, 1
        %s856 = scalar_lea.sflag [#allocation4], %s855
        %s857 = sand.u32 %s96, 1
        %s858 = smul.addr %s857, 256
        %s859 = scalar_lea.vmem [#allocation5], %s858
        // Predicated region
        $region37: #{tpu_custom_call.1} parent=31 // pred_check
          %p860 = pneg %p106
        $region38: #{tpu_custom_call.1} parent=31 // pred_check_branch
          %862 = sbr.rel (%p860) target = $region40
        $region39: #{tpu_custom_call.1} parent=31 // pred_region
          %s863 = smul.u32 2, %s20
          %s865 = ssub.s32 4096, 4096
          %866 = vsyncadd %s856, %s865
          %s867 = smul.addr %s863, 16
          %s868 = smul.addr %s867, 128
          %s869 = scalar_lea.hbm %s3, %s868
          %s870 = sshll.u32 %s859, 4
          %s871 = int_to_ptr.vmem [resolvable:$true] %s870
          %876 = dma.vmem_to_hbm [thread:$0]  %s871, 4096, %s869, %s856, 256, 256, 16
        $region40: #{tpu_custom_call.1} parent=31 // pred_fallthru
          _
      $region32: #{tpu_custom_call.1} parent=5 // pred_fallthru
        _
      %p877 = scmp.le.s32.totalorder 2, %s15
      // Predicated region
      $region41: #{tpu_custom_call.1} parent=5 // pred_check
        %p878 = pneg %p877
      $region42: #{tpu_custom_call.1} parent=5 // pred_check_branch
        %880 = sbr.rel (%p878) target = $region44
      $region43: #{tpu_custom_call.1} parent=5 // pred_region
        %s881 = ssub.s32 %s15, 2
        // Predicated region
        $region45: #{tpu_custom_call.1} parent=43 // pred_check
          %p882 = pneg %p112
        $region46: #{tpu_custom_call.1} parent=43 // pred_check_branch
          %884 = sbr.rel (%p882) target = $region48
        $region47: #{tpu_custom_call.1} parent=43 // pred_region
          %s885 = sand.u32 %s97, 1
          %s886 = scalar_lea.sflag [#allocation4], %s885
          %s887 = sand.u32 %s97, 1
          %s888 = smul.addr %s887, 256
          %s889 = scalar_lea.vmem [#allocation5], %s888
          %890 = dma.done %s886, 4096
        $region48: #{tpu_custom_call.1} parent=43 // pred_fallthru
          _
      $region44: #{tpu_custom_call.1} parent=5 // pred_fallthru
        _
    $region6: #{tpu_custom_call.1} parent=1 // loop_footer
      %s19 = sadd.s32 1, %s15
    $region7: #{tpu_custom_call.1} parent=1 // loop_footer_branch
      %14 = sbr.rel target = $region3
    $region8: #{tpu_custom_call.1} parent=1 // loop_exit
      _
    %891 = vsyncpa [#allocation3], 1
    %s892 = scalar_lea.sflag [#allocation3], 1
    %893 = vsyncpa %s892, 1
    %894 = vsyncpa [#allocation4], 1
    %s895 = scalar_lea.sflag [#allocation4], 1
    %896 = vsyncpa %s895, 1

</llo_original>
